<compile_context>
chip_gen: v6e
topology: v6e:2x2x1
jax: 0.10.0
libtpu: 0.0.40
codegen_flags: <defaults>
</compile_context>

<pallas_src>
import functools
import math

import jax
import jax.numpy as jnp
from jax.experimental import pallas as pl
from jax.experimental.pallas import tpu as pltpu


LANE = 128
_TILE_BUDGET = 12 * 1024 * 1024    # per-step (in + out) padded VMEM tile bytes
_VMEM_LIMIT = 48 * 1024 * 1024     # > v5e/v6e scoped defaults, < v7x 64 MiB physical


def _full_span_kernel(x_ref, o_ref, *, starts, window):
    # Small-T fallback.  x_ref: (R, T) row tile; o_ref: (nw, R, W) block of the
    # final output.  All starts are compile-time constants -> static slices.
    for n, s in enumerate(starts):
        o_ref[n, :, :] = x_ref[:, s : s + window]


def _group_kernel(x_ref, o_ref, *, group, window, stride):
    # Non-overlapping / gapped windows (window <= stride).
    # x_ref: (R, group*stride) span for this window group (lane width is a
    # multiple of 128); o_ref: (group, R, W) block of the final output.
    for w in range(group):
        lo = w * stride
        o_ref[w, :, :] = x_ref[:, lo : lo + window]


def _overlap_group_kernel(xa_ref, xb_ref, o_ref, *, group, window, stride):
    # Overlapping windows (window > stride).  xa_ref is this group's span and
    # xb_ref the NEXT span (same array, shifted BlockSpec), so windows that
    # straddle the span boundary use static slices only.
    span = group * stride
    for w in range(group):
        lo = w * stride
        if lo + window <= span:
            o_ref[w, :, :] = xa_ref[:, lo : lo + window]
        else:
            o_ref[w, :, :] = jnp.concatenate(
                [xa_ref[:, lo:span], xb_ref[:, : lo + window - span]], axis=-1
            )


def strided_window_layer(x, *, window_size=10, stride=None):
    """Pallas implementation of StridedWindowLayer.forward.

    x: (B, C, T) array.  Returns (num_windows, B, C, window_size).
    Windows with start + window_size > T are dropped (torch.narrow would raise
    for them) — documented deviation from the literal module code.
    """
    if stride is None:
        stride = window_size
    B, C, T = x.shape
    W = window_size
    starts = tuple(s for s in range(0, T, stride) if s + W <= T)
    nw = len(starts)
    if nw == 0:
        raise ValueError("no complete window fits in the time dimension")

    rows = B * C
    x2d = x.reshape(rows, T)
    itemsize = jnp.dtype(x.dtype).itemsize
    sub = max(8, 32 // itemsize)          # sublane packing: f32 8 / bf16 16 / int8 32
    pad_w = -(-W // LANE) * LANE          # lane-padded window width in VMEM
    pad_t = -(-T // LANE) * LANE

    def pick_rows(per_row_bytes):
        r = (_TILE_BUDGET // per_row_bytes) // sub * sub
        r = max(sub, r)
        return rows if r >= rows else r   # full row extent is always a legal block

    # Window-group size whose input span (group*stride) is a multiple of 128
    # lanes, so the span can be blocked along T (no full-T resident tile).
    group = LANE // math.gcd(stride, LANE)
    span = group * stride
    n_groups = -(-nw // group)
    overlap = W > stride
    grouped = n_groups >= 2 and span < T and (not overlap or W - stride <= span)
    # TODO(synk): windows wider than stride + span would straddle >2 spans and
    # fall back to the full-T path below (unbounded unroll for huge nw).

    if grouped:
        n_in = 2 if overlap else 1
        per_row = itemsize * (n_in * span + group * pad_w)
        R = pick_rows(per_row)
        grid = (pl.cdiv(rows, R), n_groups)
        out_spec = pl.BlockSpec((group, R, W), lambda i, g: (g, i, 0))
        if overlap:
            last_span = -(-T // span) - 1         # clamp for the "next span" view
            in_specs = [
                pl.BlockSpec((R, span), lambda i, g: (i, g)),
                pl.BlockSpec((R, span),
                             lambda i, g: (i, jnp.minimum(g + 1, last_span))),
            ]
            operands = (x2d, x2d)
            kernel = functools.partial(
                _overlap_group_kernel, group=group, window=W, stride=stride)
        else:
            # TODO(synk): for gapped strides (stride > W) this still reads the
            # gap bytes inside each span; a compaction pass could avoid that.
            in_specs = [pl.BlockSpec((R, span), lambda i, g: (i, g))]
            operands = (x2d,)
            kernel = functools.partial(
                _group_kernel, group=group, window=W, stride=stride)
        dims = ("parallel", "parallel")   # independent blocks; splits on v7x megacore
    else:
        per_row = itemsize * (pad_t + nw * pad_w)
        R = pick_rows(per_row)
        if R >= rows and rows >= 2 * sub:
            # Keep >= 2 grid steps so v7x's second TensorCore has work.
            R = -(-((rows + 1) // 2) // sub) * sub
        grid = (pl.cdiv(rows, R),)
        out_spec = pl.BlockSpec((nw, R, W), lambda i: (0, i, 0))
        in_specs = [pl.BlockSpec((R, T), lambda i: (i, 0))]
        operands = (x2d,)
        kernel = functools.partial(_full_span_kernel, starts=starts, window=W)
        dims = ("parallel",)

    in_bytes = rows * T * itemsize * (2 if (grouped and overlap) else 1)
    out_bytes = nw * rows * W * itemsize

    out = pl.pallas_call(
        kernel,
        out_shape=jax.ShapeDtypeStruct((nw, rows, W), x.dtype),
        grid=grid,
        in_specs=in_specs,
        out_specs=out_spec,
        compiler_params=pltpu.CompilerParams(
            dimension_semantics=dims,
            vmem_limit_bytes=_VMEM_LIMIT,
        ),
        cost_estimate=pl.CostEstimate(
            flops=0, transcendentals=0, bytes_accessed=in_bytes + out_bytes),
    )(*operands)

    # (nw, rows, W) -> (nw, B, C, W): contiguous reshape, no data movement.
    return out.reshape(nw, B, C, W)


def _reference(x, window_size, stride):
    T = x.shape[-1]
    starts = [s for s in range(0, T, stride) if s + window_size <= T]
    return jnp.stack([x[..., s : s + window_size] for s in starts], axis=0)


if __name__ == "__main__":
    key = jax.random.PRNGKey(0)
    k1, k2 = jax.random.split(key)

    B, C = 2, 4
    x_small = jax.random.normal(k1, (B, C, 16), dtype=jnp.float32)
    x_long = jax.random.normal(k2, (B, C, 640), dtype=jnp.float32)

    checks = [
        (x_small, 8, None),   # module default (stride == window), small T -> full-span kernel
        (x_small, 8, 4),      # overlapping stride, small T               -> full-span kernel
        (x_long, 16, 16),     # stride == window, long T                  -> grouped kernel
        (x_long, 16, 8),      # overlapping stride, long T                -> dual-view grouped kernel
        (x_long, 16, 48),     # gapped stride, long T                     -> grouped kernel
    ]
    for xi, w, s in checks:
        out = jax.block_until_ready(strided_window_layer(xi, window_size=w, stride=s))
        ref = _reference(xi, w, w if s is None else s)
        assert out.shape == ref.shape, (out.shape, ref.shape)
        assert jnp.array_equal(out, ref), f"mismatch for window={w} stride={s}"

    print("KERNEL_OK")
</pallas_src>

<mosaic_0001>
module attributes {stable_mosaic.version = 11 : i64} {
  func.func @_full_span_kernel(%arg0: i32, %arg1: memref<8x16xf32, #tpu.memory_space<vmem>>, %arg2: memref<2x8x8xf32, #tpu.memory_space<vmem>>) attributes {dimension_semantics = [#tpu.dimension_semantics<parallel>], iteration_bounds = array<i64: 1>, scalar_prefetch = 0 : i64, scratch_operands = 0 : i64, tpu.core_type = #tpu.core_type<tc>, window_params = [{transform_indices = @transform_0, window_bounds = array<i64: 8, 16>}, {transform_indices = @transform_1, window_bounds = array<i64: 2, 8, 8>}]} {
    %c0 = arith.constant 0 : index
    %c0_0 = arith.constant 0 : index
    %0 = vector.load %arg1[%c0, %c0_0] : memref<8x16xf32, #tpu.memory_space<vmem>>, vector<8x8xf32>
    %c0_1 = arith.constant 0 : index
    %c0_2 = arith.constant 0 : index
    %c0_3 = arith.constant 0 : index
    %1 = vector.load %arg2[%c0_1, %c0_2, %c0_3] : memref<2x8x8xf32, #tpu.memory_space<vmem>>, vector<1x8x8xf32>
    %2 = vector.shape_cast %1 : vector<1x8x8xf32> to vector<8x8xf32>
    %3 = vector.shape_cast %0 : vector<8x8xf32> to vector<1x8x8xf32>
    tpu.vector_store %arg2[%c0_1, %c0_2, %c0_3], %3 {strides = array<i32>} : memref<2x8x8xf32, #tpu.memory_space<vmem>>, vector<1x8x8xf32>,
    %c0_4 = arith.constant 0 : index
    %c8 = arith.constant 8 : index
    %4 = vector.load %arg1[%c0_4, %c8] : memref<8x16xf32, #tpu.memory_space<vmem>>, vector<8x8xf32>
    %c1 = arith.constant 1 : index
    %c0_5 = arith.constant 0 : index
    %c0_6 = arith.constant 0 : index
    %5 = vector.load %arg2[%c1, %c0_5, %c0_6] : memref<2x8x8xf32, #tpu.memory_space<vmem>>, vector<1x8x8xf32>
    %6 = vector.shape_cast %5 : vector<1x8x8xf32> to vector<8x8xf32>
    %7 = vector.shape_cast %4 : vector<8x8xf32> to vector<1x8x8xf32>
    tpu.vector_store %arg2[%c1, %c0_5, %c0_6], %7 {strides = array<i32>} : memref<2x8x8xf32, #tpu.memory_space<vmem>>, vector<1x8x8xf32>,
    return
  }
  func.func @transform_0(%arg0: i32) -> (i32, i32) {
    %c0_i32 = arith.constant 0 : i32
    %c0_i32_0 = arith.constant 0 : i32
    return %arg0, %c0_i32 : i32, i32
  }
  func.func @transform_1(%arg0: i32) -> (i32, i32, i32) {
    %c0_i32 = arith.constant 0 : i32
    %c0_i32_0 = arith.constant 0 : i32
    %c0_i32_1 = arith.constant 0 : i32
    return %c0_i32, %arg0, %c0_i32_0 : i32, i32, i32
  }
}

</mosaic_0001>

<llo_original>
// kernel: tpu_custom_call.1
$region0: #{tpu_custom_call.1}
  #allocation0 [shape = 'u32[]', space=smem, size = 0x4, offset = 0x4, fixed_abs, tag = 'smem constant byte address 0x4 - core index']
  #allocation1 [shape = 'u32[144,128]{1,0:T(1,128)}', space=vmem, size = 0x12000, scoped, tag = 'internal scratch']
  %s0 = inlined_call_operand.hbm [shape: f32[8,16], index: 0, kind: input, shape index: {}]
  %s1 = inlined_call_operand.hbm [shape: f32[2,8,8], index: 1, kind: output, shape index: {}]
  %s2 = sld [smem:[#allocation0]]
  $region18: #{tpu_custom_call.1} parent=0
    _
  %s4 = ssub.s32 1, %s2
  %s5 = scalar_select 0, %s4, %s2
  $region1: #{tpu_custom_call.1} parent=0
    #allocation2 [shape = 'u8[4096]{0}', space=vmem, size = 0x1000, scoped, tag = 'input window, operand 0, single buffered']
    #allocation3 [shape = 's32[1]{0}', space=sflag, size = 0x4, scoped, tag = 'scoped memory for tpu_custom_call.1']
    #allocation4 [shape = 's32[1]{0}', space=sflag, size = 0x4, scoped, tag = 'scoped memory for tpu_custom_call.1']
    #allocation5 [shape = 'u8[8192]{0}', space=vmem, size = 0x2000, scoped, tag = 'output window, operand 0, single buffered']
    %6 = vsyncpa [#allocation3], 0
    %7 = vsyncpa [#allocation4], 0
    // Predicated region
    $region2: #{tpu_custom_call.1} parent=1 // pred_check
      _
    $region3: #{tpu_custom_call.1} parent=1 // pred_check_branch
      %9 = sbr.rel (0) target = $region5
    $region4: #{tpu_custom_call.1} parent=1 // pred_region
      %s11 = ssub.s32 128, 128
      %12 = vsyncadd [#allocation3], %s11
      %s14 = sshll.u32 [#allocation2], 4
      %s15 = int_to_ptr.vmem [resolvable:$true] %s14
      %17 = dma.hbm_to_vmem [thread:$0]  %s0, 128, %s15, [#allocation3]
    $region5: #{tpu_custom_call.1} parent=1 // pred_fallthru
      _
    // Predicated region
    $region6: #{tpu_custom_call.1} parent=1 // pred_check
      _
    $region7: #{tpu_custom_call.1} parent=1 // pred_check_branch
      %19 = sbr.rel (0) target = $region9
    $region8: #{tpu_custom_call.1} parent=1 // pred_region
      %20 = dma.done [#allocation3], 128
    $region9: #{tpu_custom_call.1} parent=1 // pred_fallthru
      _
    %v21 = vld [vmem:[#allocation2] sm:$0xff]
    %vm22 = vcmask 64512
    %23 = vst.msk [vmem:[#allocation5] sm:$0xff] %vm22, %v21
    %v24 = vld [vmem:[#allocation2] sm:$0xff]
    %26 = vrot.lane.b32.xlu0 %v24, 120
    %v27 = vpop.permute.xlu0 %26
    %s29 = scalar_lea.vmem [#allocation5], 8
    %30 = vst.msk [vmem:[%s29] sm:$0xff] %vm22, %v27
    // Predicated region
    $region10: #{tpu_custom_call.1} parent=1 // pred_check
      _
    $region11: #{tpu_custom_call.1} parent=1 // pred_check_branch
      %32 = sbr.rel (0) target = $region13
    $region12: #{tpu_custom_call.1} parent=1 // pred_region
      %s34 = ssub.s32 256, 256
      %35 = vsyncadd [#allocation4], %s34
      %s36 = sshll.u32 [#allocation5], 4
      %s37 = int_to_ptr.vmem [resolvable:$true] %s36
      %42 = dma.vmem_to_hbm [thread:$0]  %s37, 256, %s1, [#allocation4], 128, 128, 8
    $region13: #{tpu_custom_call.1} parent=1 // pred_fallthru
      _
    // Predicated region
    $region14: #{tpu_custom_call.1} parent=1 // pred_check
      _
    $region15: #{tpu_custom_call.1} parent=1 // pred_check_branch
      %44 = sbr.rel (0) target = $region17
    $region16: #{tpu_custom_call.1} parent=1 // pred_region
      %45 = dma.done [#allocation4], 256
    $region17: #{tpu_custom_call.1} parent=1 // pred_fallthru
      _
    %46 = vsyncpa [#allocation3], 1
    %47 = vsyncpa [#allocation4], 1

</llo_original>
